<compile_context>
chip_gen: v7x
topology: tpu7x:2x2x1
jax: 0.10.0
libtpu: 0.0.40
codegen_flags: <defaults>
</compile_context>

<pallas_src>
import functools

import jax
import jax.numpy as jnp
from jax.experimental import pallas as pl
from jax.experimental.pallas import tpu as pltpu

# ----------------------- scaled-down synthetic BERT config -----------------------
VOCAB = 100
MAX_POS = 16
HIDDEN = 32
N_HEADS = 4
HEAD_DIM = HIDDEN // N_HEADS
INTERMEDIATE = 64
N_LAYERS = 2
N_CLASSES = 3
LN_EPS = 1e-12
DROPOUT_P = 0.3
OUT_PAD = 128          # lane-dense classifier output width (logits sliced outside)


# ================================ kernel helpers ================================

def _layernorm(h, g, b):
    mu = jnp.mean(h, axis=-1, keepdims=True)
    var = jnp.mean((h - mu) ** 2, axis=-1, keepdims=True)
    return (h - mu) * jax.lax.rsqrt(var + LN_EPS) * g + b


# ================================ Pallas kernels ================================

def _embed_ln_kernel(x_ref, g_ref, b_ref, o_ref):
    o_ref[...] = _layernorm(x_ref[...], g_ref[...], b_ref[...]).astype(o_ref.dtype)


def embed_layernorm(x, gamma, beta):
    """Pure LayerNorm over last axis. x: (M, H); gamma,beta: (1, H)."""
    return pl.pallas_call(
        _embed_ln_kernel,
        out_shape=jax.ShapeDtypeStruct(x.shape, jnp.float32),
    )(x, gamma, beta)


def _encoder_layer_kernel(x_ref, m_ref, wqkv_ref, bqkv_ref, wo_ref, bo_ref,
                          ln1g_ref, ln1b_ref, w1_ref, b1_ref, w2_ref, b2_ref,
                          ln2g_ref, ln2b_ref, o_ref, *, scale):
    # One grid step == one batch element. Everything stays in vregs/VMEM.
    x = x_ref[0]                                   # (S, H)
    bias = m_ref[0]                                # (1, S) additive key mask

    # Fused QKV projection: one MXU pass, 96-lane output slab.
    qkv = jnp.dot(x, wqkv_ref[...], preferred_element_type=jnp.float32) + bqkv_ref[...]

    # All heads computed in one kernel (static unroll; no grid steps, no transposes).
    ctxs = []
    for h in range(N_HEADS):
        lo = h * HEAD_DIM
        qh = qkv[:, lo:lo + HEAD_DIM]                                  # (S, dh)
        kh = qkv[:, HIDDEN + lo:HIDDEN + lo + HEAD_DIM]                # (S, dh)
        vh = qkv[:, 2 * HIDDEN + lo:2 * HIDDEN + lo + HEAD_DIM]        # (S, dh)
        s = jax.lax.dot_general(
            qh, kh, (((1,), (1,)), ((), ())),
            preferred_element_type=jnp.float32) * scale                # (S, S)
        s = s + bias
        s = s - jnp.max(s, axis=-1, keepdims=True)
        p = jnp.exp(s)
        p = p / jnp.sum(p, axis=-1, keepdims=True)
        ctxs.append(jnp.dot(p, vh, preferred_element_type=jnp.float32))
    ctx = jnp.concatenate(ctxs, axis=-1)                               # (S, H)

    # Output projection + residual + LayerNorm (fused epilogue).
    attn_out = jnp.dot(ctx, wo_ref[...], preferred_element_type=jnp.float32) + bo_ref[...]
    h1 = _layernorm(x + attn_out, ln1g_ref[...], ln1b_ref[...])

    # FFN (GELU) + residual + LayerNorm.
    # BERT uses erf-GELU; tanh approximation is used here for TPU friendliness.
    ffn = jnp.dot(h1, w1_ref[...], preferred_element_type=jnp.float32) + b1_ref[...]
    ffn = jax.nn.gelu(ffn, approximate=True)
    ffn = jnp.dot(ffn, w2_ref[...], preferred_element_type=jnp.float32) + b2_ref[...]
    h2 = _layernorm(h1 + ffn, ln2g_ref[...], ln2b_ref[...])

    o_ref[0] = h2.astype(o_ref.dtype)


def encoder_layer(x, mask_bias, p):
    """One fused BERT encoder layer. x: (B, S, H); mask_bias: (B, 1, S)."""
    B, S, H = x.shape

    def full(arr):
        nd = arr.ndim
        return pl.BlockSpec(arr.shape, lambda b, _nd=nd: (0,) * _nd)

    in_specs = [
        pl.BlockSpec((1, S, H), lambda b: (b, 0, 0)),      # activations
        pl.BlockSpec((1, 1, S), lambda b: (b, 0, 0)),      # mask bias
        full(p["wqkv"]), full(p["bqkv"]),
        full(p["wo"]), full(p["bo"]),
        full(p["ln1_g"]), full(p["ln1_b"]),
        full(p["w1"]), full(p["b1"]),
        full(p["w2"]), full(p["b2"]),
        full(p["ln2_g"]), full(p["ln2_b"]),
    ]
    return pl.pallas_call(
        functools.partial(_encoder_layer_kernel, scale=1.0 / (HEAD_DIM ** 0.5)),
        grid=(B,),
        in_specs=in_specs,
        out_specs=pl.BlockSpec((1, S, H), lambda b: (b, 0, 0)),
        out_shape=jax.ShapeDtypeStruct((B, S, H), jnp.float32),
        compiler_params=pltpu.CompilerParams(
            dimension_semantics=("parallel",)),            # lets v7x split batch across 2 TCs
    )(x, mask_bias, p["wqkv"], p["bqkv"], p["wo"], p["bo"],
      p["ln1_g"], p["ln1_b"], p["w1"], p["b1"], p["w2"], p["b2"],
      p["ln2_g"], p["ln2_b"])


def _pool_classifier_kernel(x_ref, u_ref, pw_ref, pb_ref, ow_ref, ob_ref, o_ref, *, p_drop):
    # BERT pooler: dense + tanh on [CLS].
    pooled = jnp.tanh(
        jnp.dot(x_ref[...], pw_ref[...], preferred_element_type=jnp.float32) + pb_ref[...])
    # nn.Dropout(p=0.3), training mode: drop with prob p, scale kept by 1/(1-p).
    keep = u_ref[...] >= p_drop
    dropped = jnp.where(keep, pooled * (1.0 / (1.0 - p_drop)), 0.0)
    # Output Linear (weight padded to 128 lanes -> unmasked lane-dense store).
    o_ref[...] = (jnp.dot(dropped, ow_ref[...], preferred_element_type=jnp.float32)
                  + ob_ref[...]).astype(o_ref.dtype)


def pool_drop_classify(cls_tok, dropout_u, pool_w, pool_b, out_w_p, out_b_p,
                       p_drop=DROPOUT_P):
    """Fused pooler + dropout + Linear. cls_tok: (B, H); returns (B, OUT_PAD)."""
    B, _ = cls_tok.shape
    return pl.pallas_call(
        functools.partial(_pool_classifier_kernel, p_drop=p_drop),
        out_shape=jax.ShapeDtypeStruct((B, OUT_PAD), jnp.float32),
    )(cls_tok, dropout_u, pool_w, pool_b, out_w_p, out_b_p)


# ================================ JAX glue (model) ================================

def bert_embeddings(input_ids, params):
    B, S = input_ids.shape
    word = jnp.take(params["word_emb"], input_ids, axis=0)          # (B, S, H)
    pos = params["pos_emb"][:S][None, :, :]                         # (1, S, H)
    ttype = params["type_emb"][0][None, None, :]                    # token_type_ids = 0
    emb = (word + pos + ttype).reshape(B * S, HIDDEN)
    emb = embed_layernorm(emb, params["emb_ln_g"], params["emb_ln_b"])
    return emb.reshape(B, S, HIDDEN)


def sentiment_classifier_forward(params, input_ids, attention_mask, dropout_rng):
    """Matches SentimentClassifier.forward(input_ids, attention_mask) -> logits (B, n_classes)."""
    B, S = input_ids.shape
    mask_bias = ((1.0 - attention_mask.astype(jnp.float32)) * -10000.0).reshape(B, 1, S)

    h = bert_embeddings(input_ids, params)
    for lp in params["layers"]:
        h = encoder_layer(h, mask_bias, lp)

    cls_tok = h[:, 0, :]                                            # (B, H)
    dropout_u = jax.random.uniform(dropout_rng, (B, HIDDEN), dtype=jnp.float32)

    logits_pad = pool_drop_classify(
        cls_tok, dropout_u,
        params["pool_w"], params["pool_b"],
        params["out_w_p"], params["out_b_p"])
    return logits_pad[:, :N_CLASSES]


# ================================ parameter init ================================

def init_params(key):
    keys = iter(jax.random.split(key, 64))

    def w(shape):
        return jax.random.normal(next(keys), shape, dtype=jnp.float32) * 0.02

    def ln():
        return jnp.ones((1, HIDDEN), jnp.float32), jnp.zeros((1, HIDDEN), jnp.float32)

    out_w = w((HIDDEN, N_CLASSES))
    params = {
        "word_emb": w((VOCAB, HIDDEN)),
        "pos_emb": w((MAX_POS, HIDDEN)),
        "type_emb": w((2, HIDDEN)),
        "pool_w": w((HIDDEN, HIDDEN)),
        "pool_b": jnp.zeros((1, HIDDEN), jnp.float32),
        # classifier weight/bias padded to 128 lanes for a lane-dense store
        "out_w_p": jnp.pad(out_w, ((0, 0), (0, OUT_PAD - N_CLASSES))),
        "out_b_p": jnp.zeros((1, OUT_PAD), jnp.float32),
        "layers": [],
    }
    params["emb_ln_g"], params["emb_ln_b"] = ln()

    for _ in range(N_LAYERS):
        lp = {
            # wq|wk|wv concatenated -> one (H, 3H) matmul per layer
            "wqkv": w((HIDDEN, 3 * HIDDEN)),
            "bqkv": jnp.zeros((1, 3 * HIDDEN), jnp.float32),
            "wo": w((HIDDEN, HIDDEN)), "bo": jnp.zeros((1, HIDDEN), jnp.float32),
            "w1": w((HIDDEN, INTERMEDIATE)), "b1": jnp.zeros((1, INTERMEDIATE), jnp.float32),
            "w2": w((INTERMEDIATE, HIDDEN)), "b2": jnp.zeros((1, HIDDEN), jnp.float32),
        }
        lp["ln1_g"], lp["ln1_b"] = ln()
        lp["ln2_g"], lp["ln2_b"] = ln()
        params["layers"].append(lp)
    return params


# ===================================== main =====================================

if __name__ == "__main__":
    params = init_params(jax.random.PRNGKey(0))

    B, S = 2, 8
    kid, kdrop = jax.random.split(jax.random.PRNGKey(0))
    input_ids = jax.random.randint(kid, (B, S), 0, VOCAB, dtype=jnp.int32)
    attention_mask = jnp.ones((B, S), dtype=jnp.int32).at[1, 6:].set(0)  # pad tail of row 1

    logits = sentiment_classifier_forward(params, input_ids, attention_mask, kdrop)
    logits = jax.block_until_ready(logits)
    assert logits.shape == (B, N_CLASSES) and logits.dtype == jnp.float32
    print("KERNEL_OK")
</pallas_src>

<mosaic_0001>
module attributes {stable_mosaic.version = 11 : i64} {
  func.func @_embed_ln_kernel(%arg0: memref<16x32xf32, #tpu.memory_space<vmem>>, %arg1: memref<1x32xf32, #tpu.memory_space<vmem>>, %arg2: memref<1x32xf32, #tpu.memory_space<vmem>>, %arg3: memref<16x32xf32, #tpu.memory_space<vmem>>) attributes {dimension_semantics = [], scalar_prefetch = 0 : i64, scratch_operands = 0 : i64, tpu.core_type = #tpu.core_type<tc>} {
    %c0 = arith.constant 0 : index
    %c0_0 = arith.constant 0 : index
    %0 = vector.load %arg0[%c0, %c0_0] : memref<16x32xf32, #tpu.memory_space<vmem>>, vector<16x32xf32>
    %c0_1 = arith.constant 0 : index
    %c0_2 = arith.constant 0 : index
    %1 = vector.load %arg1[%c0_1, %c0_2] : memref<1x32xf32, #tpu.memory_space<vmem>>, vector<1x32xf32>
    %c0_3 = arith.constant 0 : index
    %c0_4 = arith.constant 0 : index
    %2 = vector.load %arg2[%c0_3, %c0_4] : memref<1x32xf32, #tpu.memory_space<vmem>>, vector<1x32xf32>
    %cst = arith.constant dense<0.000000e+00> : vector<16xf32>
    %3 = vector.multi_reduction <add>, %0, %cst [1] : vector<16x32xf32> to vector<16xf32>
    %4 = vector.shape_cast %3 : vector<16xf32> to vector<16x1xf32>
    %cst_5 = arith.constant 3.200000e+01 : f32
    %5 = vector.broadcast %cst_5 : f32 to vector<16x1xf32>
    %6 = arith.divf %4, %5 : vector<16x1xf32>
    %7 = vector.broadcast %6 : vector<16x1xf32> to vector<16x32xf32>
    %8 = arith.subf %0, %7 : vector<16x32xf32>
    %9 = arith.mulf %8, %8 : vector<16x32xf32>
    %cst_6 = arith.constant dense<0.000000e+00> : vector<16xf32>
    %10 = vector.multi_reduction <add>, %9, %cst_6 [1] : vector<16x32xf32> to vector<16xf32>
    %11 = vector.shape_cast %10 : vector<16xf32> to vector<16x1xf32>
    %cst_7 = arith.constant 3.200000e+01 : f32
    %12 = vector.broadcast %cst_7 : f32 to vector<16x1xf32>
    %13 = arith.divf %11, %12 : vector<16x1xf32>
    %14 = vector.broadcast %6 : vector<16x1xf32> to vector<16x32xf32>
    %15 = arith.subf %0, %14 : vector<16x32xf32>
    %cst_8 = arith.constant 9.99999996E-13 : f32
    %16 = vector.broadcast %cst_8 : f32 to vector<16x1xf32>
    %17 = arith.addf %13, %16 : vector<16x1xf32>
    %18 = math.rsqrt %17 : vector<16x1xf32>
    %19 = vector.broadcast %18 : vector<16x1xf32> to vector<16x32xf32>
    %20 = arith.mulf %15, %19 : vector<16x32xf32>
    %21 = vector.broadcast %1 : vector<1x32xf32> to vector<16x32xf32>
    %22 = arith.mulf %20, %21 : vector<16x32xf32>
    %23 = vector.broadcast %2 : vector<1x32xf32> to vector<16x32xf32>
    %24 = arith.addf %22, %23 : vector<16x32xf32>
    %c0_9 = arith.constant 0 : index
    %c0_10 = arith.constant 0 : index
    %25 = vector.load %arg3[%c0_9, %c0_10] : memref<16x32xf32, #tpu.memory_space<vmem>>, vector<16x32xf32>
    tpu.vector_store %arg3[%c0_9, %c0_10], %24 {strides = array<i32>} : memref<16x32xf32, #tpu.memory_space<vmem>>, vector<16x32xf32>,
    return
  }
}

</mosaic_0001>

<llo_original>
// kernel: tpu_custom_call.1
$region0: #{tpu_custom_call.1}
  #allocation0 [shape = 'u32[]', space=smem, size = 0x4, offset = 0x4, fixed_abs, tag = 'smem constant byte address 0x4 - core index']
  #allocation1 [shape = 'u32[144,128]{1,0:T(1,128)}', space=vmem, size = 0x12000, scoped, tag = 'internal scratch']
  %s0 = inlined_call_operand.hbm [shape: f32[16,32], index: 0, kind: input, shape index: {}]
  %s1 = inlined_call_operand.vmem [shape: f32[1,32], index: 1, kind: input, shape index: {}]
  %s2 = inlined_call_operand.vmem [shape: f32[1,32], index: 2, kind: input, shape index: {}]
  %s3 = inlined_call_operand.hbm [shape: f32[16,32], index: 3, kind: output, shape index: {}]
  %s4 = sld [smem:[#allocation0]]
  $region26: #{tpu_custom_call.1} parent=0
    _
  %s6 = ssub.s32 1, %s4
  %s7 = scalar_select 0, %s6, %s4
  $region1: #{tpu_custom_call.1} parent=0
    #allocation2 [shape = 'u8[8192]{0}', space=vmem, size = 0x2000, scoped, tag = 'input window, operand 0, single buffered']
    #allocation3 [shape = 's32[1]{0}', space=sflag, size = 0x4, scoped, tag = 'scoped memory for tpu_custom_call.1']
    #allocation4 [shape = 's32[1]{0}', space=sflag, size = 0x4, scoped, tag = 'scoped memory for tpu_custom_call.1']
    #allocation5 [shape = 'u8[8192]{0}', space=vmem, size = 0x2000, scoped, tag = 'output window, operand 0, single buffered']
    %8 = vsyncpa [#allocation3], 0
    %9 = vsyncpa [#allocation4], 0
    // Predicated region
    $region2: #{tpu_custom_call.1} parent=1 // pred_check
      _
    $region3: #{tpu_custom_call.1} parent=1 // pred_check_branch
      %11 = sbr.rel (0) target = $region5
    $region4: #{tpu_custom_call.1} parent=1 // pred_region
      %s13 = ssub.s32 256, 256
      %14 = vsyncadd [#allocation3], %s13
      %s15 = sshll.u32 [#allocation2], 4
      %s16 = int_to_ptr.vmem [resolvable:$true] %s15
      %21 = dma.hbm_to_vmem [thread:$0]  %s0, 256, %s16, [#allocation3], 128, 128, 8
    $region5: #{tpu_custom_call.1} parent=1 // pred_fallthru
      _
    // Predicated region
    $region6: #{tpu_custom_call.1} parent=1 // pred_check
      _
    $region7: #{tpu_custom_call.1} parent=1 // pred_check_branch
      %23 = sbr.rel (0) target = $region9
    $region8: #{tpu_custom_call.1} parent=1 // pred_region
      _
    $region9: #{tpu_custom_call.1} parent=1 // pred_fallthru
      _
    // Predicated region
    $region10: #{tpu_custom_call.1} parent=1 // pred_check
      _
    $region11: #{tpu_custom_call.1} parent=1 // pred_check_branch
      %25 = sbr.rel (0) target = $region13
    $region12: #{tpu_custom_call.1} parent=1 // pred_region
      _
    $region13: #{tpu_custom_call.1} parent=1 // pred_fallthru
      _
    // Predicated region
    $region14: #{tpu_custom_call.1} parent=1 // pred_check
      _
    $region15: #{tpu_custom_call.1} parent=1 // pred_check_branch
      %27 = sbr.rel (0) target = $region17
    $region16: #{tpu_custom_call.1} parent=1 // pred_region
      %28 = dma.done [#allocation3], 256
    $region17: #{tpu_custom_call.1} parent=1 // pred_fallthru
      _
    %v29 = vld [vmem:[#allocation2] sm:$0xff]
    %v30 = vld [vmem:[#allocation2 + $0x8] sm:$0xff]
    %v31 = vld [vmem:[%s1] sm:$0x1]
    %v32 = vld [vmem:[%s2] sm:$0x1]
    %vm33 = vcmask 261120
    %v34 = vsel %vm33, %v29, 0.0
    %35 = vadd.xlane.f32.xlu0 %v34
    %v36 = vpop.xlane.xlu0 %35
    %v37 = vsel %vm33, %v30, 0.0
    %38 = vadd.xlane.f32.xlu0 %v37
    %v39 = vpop.xlane.xlu0 %38
    %v40 = vrcp.pop 32.0
    %v41 = vmul.f32 %v36, %v40
    %v42 = vmul.f32 %v39, %v40
    %v43 = vsub.f32 %v29, %v41
    %v44 = vsub.f32 %v30, %v42
    %v45 = vmul.f32 %v43, %v43
    %v46 = vmul.f32 %v44, %v44
    %v47 = vsel %vm33, %v45, 0.0
    %48 = vadd.xlane.f32.xlu0 %v47
    %v49 = vpop.xlane.xlu0 %48
    %v50 = vsel %vm33, %v46, 0.0
    %51 = vadd.xlane.f32.xlu0 %v50
    %v52 = vpop.xlane.xlu0 %51
    %v53 = vmul.f32 %v49, %v40
    %v54 = vmul.f32 %v52, %v40
    %v55 = vadd.f32 %v53, 1e-12
    %v56 = vadd.f32 %v54, 1e-12
    %v57 = vrsqrt.pop %v55
    %v58 = vrsqrt.pop %v56
    %v59 = vmul.f32 %v43, %v57
    %v60 = vmul.f32 %v44, %v58
    %v62 = vlaneseq
    %v63 = vshrl.u32 %v62, 7
    %v64 = vsub.s32 0, %v63
    %v65 = vrot.slane %v31, %v64
    %v67 = vmul.f32 %v59, %v65
    %v68 = vmul.f32 %v60, %v65
    %v70 = vlaneseq
    %v71 = vshrl.u32 %v70, 7
    %v72 = vsub.s32 0, %v71
    %v73 = vrot.slane %v32, %v72
    %v75 = vadd.f32 %v67, %v73
    %v76 = vadd.f32 %v68, %v73
    %77 = vst.msk [vmem:[#allocation5] sm:$0xff] %vm33, %v75
    %78 = vst.msk [vmem:[#allocation5 + $0x8] sm:$0xff] %vm33, %v76
    // Predicated region
    $region18: #{tpu_custom_call.1} parent=1 // pred_check
      _
    $region19: #{tpu_custom_call.1} parent=1 // pred_check_branch
      %80 = sbr.rel (0) target = $region21
    $region20: #{tpu_custom_call.1} parent=1 // pred_region
      %s82 = ssub.s32 256, 256
      %83 = vsyncadd [#allocation4], %s82
      %s84 = sshll.u32 [#allocation5], 4
      %s85 = int_to_ptr.vmem [resolvable:$true] %s84
      %90 = dma.vmem_to_hbm [thread:$0]  %s85, 256, %s3, [#allocation4], 128, 128, 8
    $region21: #{tpu_custom_call.1} parent=1 // pred_fallthru
      _
    // Predicated region
    $region22: #{tpu_custom_call.1} parent=1 // pred_check
      _
    $region23: #{tpu_custom_call.1} parent=1 // pred_check_branch
      %92 = sbr.rel (0) target = $region25
    $region24: #{tpu_custom_call.1} parent=1 // pred_region
      %93 = dma.done [#allocation4], 256
    $region25: #{tpu_custom_call.1} parent=1 // pred_fallthru
      _
    %94 = vsyncpa [#allocation3], 1
    %95 = vsyncpa [#allocation4], 1

</llo_original>
